<compile_context>
chip_gen: v5e
topology: v5e:2x2
jax: 0.10.0
libtpu: 0.0.40
codegen_flags: <defaults>
</compile_context>

<pallas_src>
import functools

import jax
import jax.numpy as jnp
from jax.experimental import pallas as pl
from jax.experimental.pallas import tpu as pltpu


def _round_up(x, m):
    return ((x + m - 1) // m) * m


def _pick_divisor(total, candidates):
    for c in candidates:
        if c <= total and total % c == 0:
            return c
    return total


# ----------------------------------------------------------------------------- kernel


def _sage_layer_kernel(adj_ref, hsrc_ref, hdst_ref, wself_ref, wneigh_ref, bias_ref,
                       out_ref, acc_ref, deg_ref, *, apply_relu: bool,
                       h_resident: bool, tk: int):
    k = pl.program_id(1)

    @pl.when(k == 0)
    def _():
        acc_ref[...] = jnp.zeros_like(acc_ref)
        deg_ref[...] = jnp.zeros_like(deg_ref)

    adj = adj_ref[...]                                  # bf16 0/1 tile (tm, tk)
    if h_resident:
        start = pl.multiple_of(k * tk, 128)
        hsrc = hsrc_ref[pl.ds(start, tk), :]            # slice the resident copy
    else:
        hsrc = hsrc_ref[...]

    # neighbor-sum (bf16 MXU, f32 accumulation) and in-degree row-sum
    acc_ref[...] += jnp.dot(adj, hsrc, preferred_element_type=jnp.float32)
    deg_ref[...] += jnp.sum(adj.astype(jnp.float32), axis=1, keepdims=True)

    @pl.when(k == pl.num_programs(1) - 1)
    def _():
        deg = deg_ref[...]
        inv = jnp.where(deg > 0.0, 1.0 / jnp.maximum(deg, 1.0), 0.0)
        agg = (acc_ref[...] * inv).astype(jnp.bfloat16)          # mean aggregation
        # self + neighbor transforms as two accumulating bf16 dots (no lane concat)
        out = jnp.dot(hdst_ref[...], wself_ref[...], preferred_element_type=jnp.float32)
        out = out + jnp.dot(agg, wneigh_ref[...], preferred_element_type=jnp.float32)
        out = out + bias_ref[...]
        if apply_relu:
            out = jnp.maximum(out, 0.0)
        out_ref[...] = out.astype(out_ref.dtype)


# ----------------------------------------------------------------------------- wrapper


def sage_layer(adj_p, h_p, w_self_p, w_neigh_p, bias_p, *, apply_relu,
               out_dtype=jnp.bfloat16, tm_max=512, tk_max=2048,
               h_resident_bytes=8 << 20):
    """One SAGEConv('mean') layer on pre-padded inputs (no per-call copies).

    adj_p:  [PD, PS]   bf16 0/1, PD and PS multiples of 128, zero padded.
    h_p:    [PS, IN]   bf16 src features (IN multiple of 128, zero padded).
    w_*_p:  [IN, OUT]  bf16 weights (zero padded), bias_p: [1, OUT] f32.
    """
    PD, PS = adj_p.shape
    PS_h, IN = h_p.shape
    IN_w, OUT = w_self_p.shape
    assert PS_h == PS and IN_w == IN, (adj_p.shape, h_p.shape, w_self_p.shape)
    assert PD % 128 == 0 and PS % 128 == 0 and IN % 128 == 0 and OUT % 128 == 0

    # dst tile: biggest divisor <= tm_max; split once so v7x's 2 TCs both get work
    tm = _pick_divisor(PD, (min(tm_max, 512), 384, 256, 128))
    if PD // tm < 2 and PD >= 256:
        tm = PD // 2
    # src (reduction) tile: as large as allowed
    tk = _pick_divisor(PS, (min(tk_max, 2048), 1536, 1024, 512, 256, 128))

    # keep h_src fully VMEM-resident (fetched exactly once) when it fits
    h_resident = PS * IN * 2 <= h_resident_bytes
    if h_resident:
        hsrc_spec = pl.BlockSpec((PS, IN), lambda i, k: (0, 0))
    else:
        hsrc_spec = pl.BlockSpec((tk, IN), lambda i, k: (k, 0))

    out_itemsize = jnp.dtype(out_dtype).itemsize
    est = (2 * tm * tk * 2                                        # adj (double-buffered, bf16)
           + (2 * PS * IN * 2 if h_resident else 2 * tk * IN * 2)  # h_src
           + 2 * tm * IN * 2                                      # h_dst tiles
           + 2 * 2 * IN * OUT * 2                                 # W_self + W_neigh
           + 2 * OUT * 4                                          # bias
           + 2 * tm * OUT * out_itemsize                          # output tiles
           + tm * IN * 4 + tm * 4)                                # scratch acc + deg
    vmem_limit = int(min(max(int(est * 1.25) + (4 << 20), 32 << 20), 48 << 20))

    grid = (PD // tm, PS // tk)
    kern = functools.partial(_sage_layer_kernel, apply_relu=apply_relu,
                             h_resident=h_resident, tk=tk)

    return pl.pallas_call(
        kern,
        out_shape=jax.ShapeDtypeStruct((PD, OUT), out_dtype),
        grid_spec=pltpu.PrefetchScalarGridSpec(
            num_scalar_prefetch=0,
            grid=grid,
            in_specs=[
                pl.BlockSpec((tm, tk), lambda i, k: (i, k)),     # adj tile
                hsrc_spec,                                       # h_src (resident or tiled)
                pl.BlockSpec((tm, IN), lambda i, k: (i, 0)),     # h_dst tile (same array)
                pl.BlockSpec((IN, OUT), lambda i, k: (0, 0)),    # W_self
                pl.BlockSpec((IN, OUT), lambda i, k: (0, 0)),    # W_neigh
                pl.BlockSpec((1, OUT), lambda i, k: (0, 0)),     # bias
            ],
            out_specs=pl.BlockSpec((tm, OUT), lambda i, k: (i, 0)),
            scratch_shapes=[
                pltpu.VMEM((tm, IN), jnp.float32),   # neighbor-sum accumulator
                pltpu.VMEM((tm, 1), jnp.float32),    # in-degree accumulator
            ],
        ),
        compiler_params=pltpu.CompilerParams(
            dimension_semantics=("parallel", "arbitrary"),
            vmem_limit_bytes=vmem_limit,
        ),
    )(adj_p, h_p, h_p, w_self_p, w_neigh_p, bias_p)


# ----------------------------------------------------------------------------- data prep (one-time)


def prepare_blocks_and_features(blocks, x):
    """One-time padding/dtype prep: node dims -> multiples of 128, bf16 streams."""
    padded_blocks = []
    for adj in blocks:
        D, S = adj.shape
        PD, PS = _round_up(D, 128), _round_up(S, 128)
        a = jnp.zeros((PD, PS), jnp.bfloat16).at[:D, :S].set(adj.astype(jnp.bfloat16))
        padded_blocks.append(a)
    S0, F = x.shape
    PS0, PF = _round_up(S0, 128), _round_up(F, 128)
    xp = jnp.zeros((PS0, PF), jnp.bfloat16).at[:S0, :F].set(x.astype(jnp.bfloat16))
    return padded_blocks, xp


def prepare_params(params, in_feats):
    """One-time weight prep: bf16 weights with in/out dims zero-padded to 128."""
    prepared = []
    in_p = _round_up(in_feats, 128)
    for (w_self, w_neigh, bias) in params:
        fin, fout = w_self.shape
        out_p = _round_up(fout, 128)
        ws = jnp.zeros((in_p, out_p), jnp.bfloat16).at[:fin, :fout].set(
            w_self.astype(jnp.bfloat16))
        wn = jnp.zeros((in_p, out_p), jnp.bfloat16).at[:fin, :fout].set(
            w_neigh.astype(jnp.bfloat16))
        b = jnp.zeros((1, out_p), jnp.float32).at[0, :fout].set(bias.astype(jnp.float32))
        prepared.append((ws, wn, b))
        in_p = out_p
    return prepared


def init_sage_params(key, in_feats, n_hidden, n_classes, n_layers):
    """Deterministic glorot-uniform init; weights [in, out], bias [out]."""
    dims = [in_feats] + [n_hidden] * (n_layers - 1) + [n_classes]
    params = []
    for l in range(n_layers):
        fin, fout = dims[l], dims[l + 1]
        key, k1, k2 = jax.random.split(key, 3)
        lim = (6.0 / (fin + fout)) ** 0.5
        w_self = jax.random.uniform(k1, (fin, fout), jnp.float32, -lim, lim)
        w_neigh = jax.random.uniform(k2, (fin, fout), jnp.float32, -lim, lim)
        bias = jnp.zeros((fout,), jnp.float32)
        params.append((w_self, w_neigh, bias))
    return params


# ----------------------------------------------------------------------------- forward


def sage_forward(padded_blocks, h, padded_params):
    """padded_blocks / h / params from prepare_*; returns padded final activations."""
    n_layers = len(padded_params)
    for l, (adj, (ws, wn, b)) in enumerate(zip(padded_blocks, padded_params)):
        assert adj.shape[1] == h.shape[0], (adj.shape, h.shape)
        last = (l == n_layers - 1)
        h = sage_layer(adj, h, ws, wn, b, apply_relu=not last,
                       out_dtype=jnp.float32 if last else jnp.bfloat16)
    return h


def sage_reference(blocks, x, params):
    """Pure-JAX f32 reference of the dgl SAGEConv('mean') stack."""
    h = x
    n_layers = len(params)
    for l, (adj, (w_self, w_neigh, bias)) in enumerate(zip(blocks, params)):
        num_dst = adj.shape[0]
        adj = adj.astype(jnp.float32)
        deg = adj.sum(axis=1, keepdims=True)
        h_neigh = jnp.where(deg > 0, (adj @ h) / jnp.maximum(deg, 1.0), 0.0)
        out = h[:num_dst] @ w_self + h_neigh @ w_neigh + bias
        if l != n_layers - 1:
            out = jnp.maximum(out, 0.0)
        h = out
    return h


if __name__ == "__main__":
    key = jax.random.PRNGKey(0)

    in_feats, n_hidden, n_classes, n_layers = 32, 32, 8, 2
    # sampled block sizes: layer-0 block 64 src -> 32 dst, layer-1 block 32 src -> 16 dst
    src_sizes = [64, 32]
    dst_sizes = [32, 16]

    key, kx, ka0, ka1 = jax.random.split(key, 4)
    x = jax.random.normal(kx, (src_sizes[0], in_feats), jnp.float32)
    blocks = [
        (jax.random.uniform(ka0, (dst_sizes[0], src_sizes[0])) < 0.3).astype(jnp.float32),
        (jax.random.uniform(ka1, (dst_sizes[1], src_sizes[1])) < 0.3).astype(jnp.float32),
    ]

    key, kp = jax.random.split(key)
    params = init_sage_params(kp, in_feats, n_hidden, n_classes, n_layers)

    # one-time data prep (padding + dtype conversion); kernels never copy/pad
    pblocks, px = prepare_blocks_and_features(blocks, x)
    pparams = prepare_params(params, in_feats)

    out_padded = sage_forward(pblocks, px, pparams)
    out = out_padded[:dst_sizes[-1], :n_classes]
    jax.block_until_ready(out)
    assert out.shape == (dst_sizes[-1], n_classes), out.shape

    ref = sage_reference(blocks, x, params)
    err = float(jnp.max(jnp.abs(out - ref)))
    assert err < 0.1, f"max abs error vs reference: {err}"

    print("KERNEL_OK")
</pallas_src>

<mosaic_0001>
module attributes {stable_mosaic.version = 11 : i64} {
  func.func @_sage_layer_kernel(%arg0: i32, %arg1: i32, %arg2: memref<128x128xbf16, #tpu.memory_space<vmem>>, %arg3: memref<128x128xbf16, #tpu.memory_space<vmem>>, %arg4: memref<128x128xbf16, #tpu.memory_space<vmem>>, %arg5: memref<128x128xbf16, #tpu.memory_space<vmem>>, %arg6: memref<128x128xbf16, #tpu.memory_space<vmem>>, %arg7: memref<1x128xf32, #tpu.memory_space<vmem>>, %arg8: memref<128x128xbf16, #tpu.memory_space<vmem>>, %arg9: memref<128x128xf32, #tpu.memory_space<vmem>>, %arg10: memref<128x1xf32, #tpu.memory_space<vmem>>) attributes {dimension_semantics = [#tpu.dimension_semantics<parallel>, #tpu.dimension_semantics<arbitrary>], iteration_bounds = array<i64: 1, 1>, scalar_prefetch = 0 : i64, scratch_operands = 2 : i64, tpu.core_type = #tpu.core_type<tc>, window_params = [{transform_indices = @transform_0, window_bounds = array<i64: 128, 128>}, {pipeline_mode = #tpu.pipeline_mode<synchronous>, transform_indices = @transform_1, window_bounds = array<i64: 128, 128>}, {transform_indices = @transform_2, window_bounds = array<i64: 128, 128>}, {pipeline_mode = #tpu.pipeline_mode<synchronous>, transform_indices = @transform_3, window_bounds = array<i64: 128, 128>}, {pipeline_mode = #tpu.pipeline_mode<synchronous>, transform_indices = @transform_4, window_bounds = array<i64: 128, 128>}, {pipeline_mode = #tpu.pipeline_mode<synchronous>, transform_indices = @transform_5, window_bounds = array<i64: 1, 128>}, {transform_indices = @transform_6, window_bounds = array<i64: 128, 128>}]} {
    %c0_i32 = arith.constant 0 : i32
    %0 = arith.cmpi eq, %arg1, %c0_i32 : i32
    %1 = arith.extui %0 : i1 to i32
    %c0_i32_0 = arith.constant 0 : i32
    %2 = arith.cmpi ne, %1, %c0_i32_0 : i32
    scf.if %2 {
      %cst_14 = arith.constant 0.000000e+00 : f32
      %21 = vector.broadcast %cst_14 : f32 to vector<128x128xf32>
      %c0_15 = arith.constant 0 : index
      %c0_16 = arith.constant 0 : index
      %22 = vector.load %arg9[%c0_15, %c0_16] : memref<128x128xf32, #tpu.memory_space<vmem>>, vector<128x128xf32>
      tpu.vector_store %arg9[%c0_15, %c0_16], %21 {strides = array<i32>} : memref<128x128xf32, #tpu.memory_space<vmem>>, vector<128x128xf32>,
      %cst_17 = arith.constant 0.000000e+00 : f32
      %23 = vector.broadcast %cst_17 : f32 to vector<128x1xf32>
      %c0_18 = arith.constant 0 : index
      %c0_19 = arith.constant 0 : index
      %24 = vector.load %arg10[%c0_18, %c0_19] : memref<128x1xf32, #tpu.memory_space<vmem>>, vector<128x1xf32>
      tpu.vector_store %arg10[%c0_18, %c0_19], %23 {strides = array<i32>} : memref<128x1xf32, #tpu.memory_space<vmem>>, vector<128x1xf32>,
    } else {
    }
    %c0 = arith.constant 0 : index
    %c0_1 = arith.constant 0 : index
    %3 = vector.load %arg2[%c0, %c0_1] : memref<128x128xbf16, #tpu.memory_space<vmem>>, vector<128x128xbf16>
    %c128_i32 = arith.constant 128 : i32
    %4 = arith.muli %arg1, %c128_i32 : i32
    %5 = tpu.assume_multiple %4, 128 : i32
    %6 = arith.index_cast %5 : i32 to index
    %c0_2 = arith.constant 0 : index
    %7 = vector.load %arg3[%6, %c0_2] : memref<128x128xbf16, #tpu.memory_space<vmem>>, vector<128x128xbf16>
    %c0_3 = arith.constant 0 : index
    %c0_4 = arith.constant 0 : index
    %8 = vector.load %arg9[%c0_3, %c0_4] : memref<128x128xf32, #tpu.memory_space<vmem>>, vector<128x128xf32>
    %cst = arith.constant dense<0.000000e+00> : vector<128x128xf32>
    %9 = tpu.matmul %3, %7, %cst {dimension_numbers = #tpu.dot_dimension_numbers<[1], [0], [0], [1], [0, 0, 1, 1], [], []>} : vector<128x128xbf16>, vector<128x128xbf16>, vector<128x128xf32> -> vector<128x128xf32>
    %10 = arith.addf %8, %9 : vector<128x128xf32>
    %c0_5 = arith.constant 0 : index
    %c0_6 = arith.constant 0 : index
    %11 = vector.load %arg9[%c0_5, %c0_6] : memref<128x128xf32, #tpu.memory_space<vmem>>, vector<128x128xf32>
    tpu.vector_store %arg9[%c0_5, %c0_6], %10 {strides = array<i32>} : memref<128x128xf32, #tpu.memory_space<vmem>>, vector<128x128xf32>,
    %c0_7 = arith.constant 0 : index
    %c0_8 = arith.constant 0 : index
    %12 = vector.load %arg10[%c0_7, %c0_8] : memref<128x1xf32, #tpu.memory_space<vmem>>, vector<128x1xf32>
    %13 = arith.extf %3 : vector<128x128xbf16> to vector<128x128xf32>
    %cst_9 = arith.constant dense<0.000000e+00> : vector<128xf32>
    %14 = vector.multi_reduction <add>, %13, %cst_9 [1] : vector<128x128xf32> to vector<128xf32>
    %15 = vector.shape_cast %14 : vector<128xf32> to vector<128x1xf32>
    %16 = arith.addf %12, %15 : vector<128x1xf32>
    %c0_10 = arith.constant 0 : index
    %c0_11 = arith.constant 0 : index
    %17 = vector.load %arg10[%c0_10, %c0_11] : memref<128x1xf32, #tpu.memory_space<vmem>>, vector<128x1xf32>
    tpu.vector_store %arg10[%c0_10, %c0_11], %16 {strides = array<i32>} : memref<128x1xf32, #tpu.memory_space<vmem>>, vector<128x1xf32>,
    %c0_i32_12 = arith.constant 0 : i32
    %18 = arith.cmpi eq, %arg1, %c0_i32_12 : i32
    %19 = arith.extui %18 : i1 to i32
    %c0_i32_13 = arith.constant 0 : i32
    %20 = arith.cmpi ne, %19, %c0_i32_13 : i32
    scf.if %20 {
      %c0_14 = arith.constant 0 : index
      %c0_15 = arith.constant 0 : index
      %21 = vector.load %arg10[%c0_14, %c0_15] : memref<128x1xf32, #tpu.memory_space<vmem>>, vector<128x1xf32>
      %cst_16 = arith.constant 0.000000e+00 : f32
      %22 = vector.broadcast %cst_16 : f32 to vector<128x1xf32>
      %23 = arith.cmpf ogt, %21, %22 : vector<128x1xf32>
      %cst_17 = arith.constant 1.000000e+00 : f32
      %24 = vector.broadcast %cst_17 : f32 to vector<128x1xf32>
      %25 = arith.maximumf %21, %24 : vector<128x1xf32>
      %cst_18 = arith.constant 1.000000e+00 : f32
      %26 = vector.broadcast %cst_18 : f32 to vector<128x1xf32>
      %27 = arith.divf %26, %25 : vector<128x1xf32>
      %cst_19 = arith.constant 0.000000e+00 : f32
      %28 = vector.broadcast %cst_19 : f32 to vector<128x1xf32>
      %29 = arith.select %23, %27, %28 : vector<128x1xi1>, vector<128x1xf32>
      %c0_20 = arith.constant 0 : index
      %c0_21 = arith.constant 0 : index
      %30 = vector.load %arg9[%c0_20, %c0_21] : memref<128x128xf32, #tpu.memory_space<vmem>>, vector<128x128xf32>
      %31 = vector.broadcast %29 : vector<128x1xf32> to vector<128x128xf32>
      %32 = arith.mulf %30, %31 : vector<128x128xf32>
      %33 = arith.truncf %32 : vector<128x128xf32> to vector<128x128xbf16>
      %c0_22 = arith.constant 0 : index
      %c0_23 = arith.constant 0 : index
      %34 = vector.load %arg4[%c0_22, %c0_23] : memref<128x128xbf16, #tpu.memory_space<vmem>>, vector<128x128xbf16>
      %c0_24 = arith.constant 0 : index
      %c0_25 = arith.constant 0 : index
      %35 = vector.load %arg5[%c0_24, %c0_25] : memref<128x128xbf16, #tpu.memory_space<vmem>>, vector<128x128xbf16>
      %cst_26 = arith.constant dense<0.000000e+00> : vector<128x128xf32>
      %36 = tpu.matmul %34, %35, %cst_26 {dimension_numbers = #tpu.dot_dimension_numbers<[1], [0], [0], [1], [0, 0, 1, 1], [], []>} : vector<128x128xbf16>, vector<128x128xbf16>, vector<128x128xf32> -> vector<128x128xf32>
      %c0_27 = arith.constant 0 : index
      %c0_28 = arith.constant 0 : index
      %37 = vector.load %arg6[%c0_27, %c0_28] : memref<128x128xbf16, #tpu.memory_space<vmem>>, vector<128x128xbf16>
      %cst_29 = arith.constant dense<0.000000e+00> : vector<128x128xf32>
      %38 = tpu.matmul %33, %37, %cst_29 {dimension_numbers = #tpu.dot_dimension_numbers<[1], [0], [0], [1], [0, 0, 1, 1], [], []>} : vector<128x128xbf16>, vector<128x128xbf16>, vector<128x128xf32> -> vector<128x128xf32>
      %39 = arith.addf %36, %38 : vector<128x128xf32>
      %c0_30 = arith.constant 0 : index
      %c0_31 = arith.constant 0 : index
      %40 = vector.load %arg7[%c0_30, %c0_31] : memref<1x128xf32, #tpu.memory_space<vmem>>, vector<1x128xf32>
      %41 = vector.broadcast %40 : vector<1x128xf32> to vector<128x128xf32>
      %42 = arith.addf %39, %41 : vector<128x128xf32>
      %cst_32 = arith.constant 0.000000e+00 : f32
      %43 = vector.broadcast %cst_32 : f32 to vector<128x128xf32>
      %44 = arith.maximumf %42, %43 : vector<128x128xf32>
      %45 = arith.truncf %44 : vector<128x128xf32> to vector<128x128xbf16>
      %c0_33 = arith.constant 0 : index
      %c0_34 = arith.constant 0 : index
      %46 = vector.load %arg8[%c0_33, %c0_34] : memref<128x128xbf16, #tpu.memory_space<vmem>>, vector<128x128xbf16>
      tpu.vector_store %arg8[%c0_33, %c0_34], %45 {strides = array<i32>} : memref<128x128xbf16, #tpu.memory_space<vmem>>, vector<128x128xbf16>,
    } else {
    }
    return
  }
  func.func @transform_0(%arg0: i32, %arg1: i32) -> (i32, i32) {
    %c0_i32 = arith.constant 0 : i32
    return %arg0, %arg1 : i32, i32
  }
  func.func @transform_1(%arg0: i32, %arg1: i32) -> (i32, i32) {
    %c0_i32 = arith.constant 0 : i32
    %c0_i32_0 = arith.constant 0 : i32
    %c0_i32_1 = arith.constant 0 : i32
    return %c0_i32, %c0_i32_0 : i32, i32
  }
  func.func @transform_2(%arg0: i32, %arg1: i32) -> (i32, i32) {
    %c0_i32 = arith.constant 0 : i32
    %c0_i32_0 = arith.constant 0 : i32
    return %arg0, %c0_i32 : i32, i32
  }
  func.func @transform_3(%arg0: i32, %arg1: i32) -> (i32, i32) {
    %c0_i32 = arith.constant 0 : i32
    %c0_i32_0 = arith.constant 0 : i32
    %c0_i32_1 = arith.constant 0 : i32
    return %c0_i32, %c0_i32_0 : i32, i32
  }
  func.func @transform_4(%arg0: i32, %arg1: i32) -> (i32, i32) {
    %c0_i32 = arith.constant 0 : i32
    %c0_i32_0 = arith.constant 0 : i32
    %c0_i32_1 = arith.constant 0 : i32
    return %c0_i32, %c0_i32_0 : i32, i32
  }
  func.func @transform_5(%arg0: i32, %arg1: i32) -> (i32, i32) {
    %c0_i32 = arith.constant 0 : i32
    %c0_i32_0 = arith.constant 0 : i32
    %c0_i32_1 = arith.constant 0 : i32
    return %c0_i32, %c0_i32_0 : i32, i32
  }
  func.func @transform_6(%arg0: i32, %arg1: i32) -> (i32, i32) {
    %c0_i32 = arith.constant 0 : i32
    %c0_i32_0 = arith.constant 0 : i32
    return %arg0, %c0_i32 : i32, i32
  }
}

</mosaic_0001>

<llo_original>
// kernel: tpu_custom_call.1
$region0: #{tpu_custom_call.1}
  #allocation0 [shape = 'u32[]', space=smem, size = 0x4, offset = 0x4, fixed_abs, tag = 'smem constant byte address 0x4 - core index']
  #allocation1 [shape = 'u32[72,128]{1,0:T(1,128)}', space=vmem, size = 0x9000, scoped, tag = 'internal scratch']
  #allocation2 [shape = 'f32[128,128]{1,0:T(8,128)}', space=vmem, size = 0x10000, scoped, tag = 'scratch operand']
  #allocation3 [shape = 'f32[128,1]{1,0:T(8,128)}', space=vmem, size = 0x10000, scoped, tag = 'scratch operand']
  %s0 = inlined_call_operand.hbm [shape: bf16[128,128], index: 0, kind: input, shape index: {}]
  %s1 = inlined_call_operand.hbm [shape: bf16[128,128], index: 1, kind: input, shape index: {}]
  %s2 = inlined_call_operand.hbm [shape: bf16[128,128], index: 2, kind: input, shape index: {}]
  %s3 = inlined_call_operand.hbm [shape: bf16[128,128], index: 3, kind: input, shape index: {}]
  %s4 = inlined_call_operand.hbm [shape: bf16[128,128], index: 4, kind: input, shape index: {}]
  %s5 = inlined_call_operand.vmem [shape: f32[1,128], index: 5, kind: input, shape index: {}]
  %s6 = inlined_call_operand.hbm [shape: bf16[128,128], index: 6, kind: output, shape index: {}]
  %s7 = sld [smem:[#allocation0]]
  $region62: #{tpu_custom_call.1} parent=0
    _
  %s9 = ssub.s32 1, %s7
  %s10 = scalar_select 0, %s9, %s7
  $region1: #{tpu_custom_call.1} parent=0
    #allocation4 [shape = 'u8[32768]{0}', space=vmem, size = 0x8000, scoped, tag = 'input window, operand 0, single buffered']
    #allocation5 [shape = 's32[1]{0}', space=sflag, size = 0x4, scoped, tag = 'scoped memory for tpu_custom_call.1']
    #allocation6 [shape = 's32[1]{0}', space=sflag, size = 0x4, scoped, tag = 'scoped memory for tpu_custom_call.1']
    #allocation7 [shape = 'u8[32768]{0}', space=vmem, size = 0x8000, scoped, tag = 'input window, operand 1, single buffered']
    #allocation8 [shape = 's32[1]{0}', space=sflag, size = 0x4, scoped, tag = 'scoped memory for tpu_custom_call.1']
    #allocation9 [shape = 'u8[32768]{0}', space=vmem, size = 0x8000, scoped, tag = 'input window, operand 2, single buffered']
    #allocation10 [shape = 'u8[32768]{0}', space=vmem, size = 0x8000, scoped, tag = 'input window, operand 3, single buffered']
    #allocation11 [shape = 's32[1]{0}', space=sflag, size = 0x4, scoped, tag = 'scoped memory for tpu_custom_call.1']
    #allocation12 [shape = 'u8[32768]{0}', space=vmem, size = 0x8000, scoped, tag = 'input window, operand 4, single buffered']
    #allocation13 [shape = 'u8[32768]{0}', space=vmem, size = 0x8000, scoped, tag = 'output window, operand 0, single buffered']
    %11 = vsyncpa [#allocation5], 0
    %12 = vsyncpa [#allocation8], 0
    %13 = vsyncpa [#allocation11], 0
    %14 = vsyncpa [#allocation6], 0
    // Predicated region
    $region2: #{tpu_custom_call.1} parent=1 // pred_check
      _
    $region3: #{tpu_custom_call.1} parent=1 // pred_check_branch
      %16 = sbr.rel (0) target = $region5
    $region4: #{tpu_custom_call.1} parent=1 // pred_region
      %18 = vsyncadd [#allocation5], 0
      %s19 = sshll.u32 %s0, 4
      %s20 = int_to_ptr.hbm [resolvable:$true] %s19
      %s21 = sshll.u32 [#allocation4], 4
      %s22 = int_to_ptr.vmem [resolvable:$true] %s21
      %27 = dma.hbm_to_vmem [thread:$0]  %s20, 1024, %s22, [#allocation5], 64, 64, 4
    $region5: #{tpu_custom_call.1} parent=1 // pred_fallthru
      _
    // Predicated region
    $region6: #{tpu_custom_call.1} parent=1 // pred_check
      _
    $region7: #{tpu_custom_call.1} parent=1 // pred_check_branch
      %29 = sbr.rel (0) target = $region9
    $region8: #{tpu_custom_call.1} parent=1 // pred_region
      %31 = vsyncadd [#allocation8], 0
      %s32 = sshll.u32 %s1, 4
      %s33 = int_to_ptr.hbm [resolvable:$true] %s32
      %s34 = sshll.u32 [#allocation7], 4
      %s35 = int_to_ptr.vmem [resolvable:$true] %s34
      %40 = dma.hbm_to_vmem [thread:$0]  %s33, 1024, %s35, [#allocation8], 64, 64, 4
    $region9: #{tpu_custom_call.1} parent=1 // pred_fallthru
      _
    // Predicated region
    $region10: #{tpu_custom_call.1} parent=1 // pred_check
      _
    $region11: #{tpu_custom_call.1} parent=1 // pred_check_branch
      %42 = sbr.rel (0) target = $region13
    $region12: #{tpu_custom_call.1} parent=1 // pred_region
      %44 = vsyncadd [#allocation8], 0
      %s45 = sshll.u32 %s2, 4
      %s46 = int_to_ptr.hbm [resolvable:$true] %s45
      %s47 = sshll.u32 [#allocation9], 4
      %s48 = int_to_ptr.vmem [resolvable:$true] %s47
      %53 = dma.hbm_to_vmem [thread:$0]  %s46, 1024, %s48, [#allocation8], 64, 64, 4
    $region13: #{tpu_custom_call.1} parent=1 // pred_fallthru
      _
    // Predicated region
    $region14: #{tpu_custom_call.1} parent=1 // pred_check
      _
    $region15: #{tpu_custom_call.1} parent=1 // pred_check_branch
      %55 = sbr.rel (0) target = $region17
    $region16: #{tpu_custom_call.1} parent=1 // pred_region
      %57 = vsyncadd [#allocation11], 0
      %s58 = sshll.u32 %s3, 4
      %s59 = int_to_ptr.hbm [resolvable:$true] %s58
      %s60 = sshll.u32 [#allocation10], 4
      %s61 = int_to_ptr.vmem [resolvable:$true] %s60
      %66 = dma.hbm_to_vmem [thread:$0]  %s59, 1024, %s61, [#allocation11], 64, 64, 4
    $region17: #{tpu_custom_call.1} parent=1 // pred_fallthru
      _
    // Predicated region
    $region18: #{tpu_custom_call.1} parent=1 // pred_check
      _
    $region19: #{tpu_custom_call.1} parent=1 // pred_check_branch
      %68 = sbr.rel (0) target = $region21
    $region20: #{tpu_custom_call.1} parent=1 // pred_region
      %70 = vsyncadd [#allocation11], 0
      %s71 = sshll.u32 %s4, 4
      %s72 = int_to_ptr.hbm [resolvable:$true] %s71
      %s73 = sshll.u32 [#allocation12], 4
      %s74 = int_to_ptr.vmem [resolvable:$true] %s73
      %79 = dma.hbm_to_vmem [thread:$0]  %s72, 1024, %s74, [#allocation11], 64, 64, 4
    $region21: #{tpu_custom_call.1} parent=1 // pred_fallthru
      _
    // Predicated region
    $region22: #{tpu_custom_call.1} parent=1 // pred_check
      _
    $region23: #{tpu_custom_call.1} parent=1 // pred_check_branch
      %81 = sbr.rel (0) target = $region25
    $region24: #{tpu_custom_call.1} parent=1 // pred_region
      _
    $region25: #{tpu_custom_call.1} parent=1 // pred_fallthru
      _
    // Predicated region
    $region26: #{tpu_custom_call.1} parent=1 // pred_check
      _
    $region27: #{tpu_custom_call.1} parent=1 // pred_check_branch
      %83 = sbr.rel (0) target = $region29
    $region28: #{tpu_custom_call.1} parent=1 // pred_region
      %85 = dma.done [#allocation5], 1024
    $region29: #{tpu_custom_call.1} parent=1 // pred_fallthru
      _
    // Predicated region
    $region30: #{tpu_custom_call.1} parent=1 // pred_check
      _
    $region31: #{tpu_custom_call.1} parent=1 // pred_check_branch
      %87 = sbr.rel (0) target = $region33
    $region32: #{tpu_custom_call.1} parent=1 // pred_region
      %89 = dma.done [#allocation8], 1024
    $region33: #{tpu_custom_call.1} parent=1 // pred_fallthru
      _
    // Predicated region
    $region34: #{tpu_custom_call.1} parent=1 // pred_check
      _
    $region35: #{tpu_custom_call.1} parent=1 // pred_check_branch
      %91 = sbr.rel (0) target = $region37
    $region36: #{tpu_custom_call.1} parent=1 // pred_region
      %93 = dma.done [#allocation8], 1024
    $region37: #{tpu_custom_call.1} parent=1 // pred_fallthru
      _
    // Predicated region
    $region38: #{tpu_custom_call.1} parent=1 // pred_check
      _
    $region39: #{tpu_custom_call.1} parent=1 // pred_check_branch
      %95 = sbr.rel (0) target = $region41
    $region40: #{tpu_custom_call.1} parent=1 // pred_region
      %97 = dma.done [#allocation11], 1024
    $region41: #{tpu_custom_call.1} parent=1 // pred_fallthru
      _
    // Predicated region
    $region42: #{tpu_custom_call.1} parent=1 // pred_check
      _
    $region43: #{tpu_custom_call.1} parent=1 // pred_check_branch
      %99 = sbr.rel (0) target = $region45
    $region44: #{tpu_custom_call.1} parent=1 // pred_region
      %101 = dma.done [#allocation11], 1024
    $region45: #{tpu_custom_call.1} parent=1 // pred_fallthru
      _
    %p102 = scmp.eq.s32.totalorder 0, 0
    // Predicated region
    $region46: #{tpu_custom_call.1} parent=1 // pred_check
      %p103 = pneg %p102
    $region47: #{tpu_custom_call.1} parent=1 // pred_check_branch
      %105 = sbr.rel (%p103) target = $region49
    $region48: #{tpu_custom_call.1} parent=1 // pred_region
      %106 = vst [vmem:[#allocation2] sm:$0xff] 0.0
      %107 = vst [vmem:[#allocation2 + $0x8] sm:$0xff] 0.0
      %108 = vst [vmem:[#allocation2 + $0x10] sm:$0xff] 0.0
      %109 = vst [vmem:[#allocation2 + $0x18] sm:$0xff] 0.0
      %110 = vst [vmem:[#allocation2 + $0x20] sm:$0xff] 0.0
      %111 = vst [vmem:[#allocation2 + $0x28] sm:$0xff] 0.0
      %112 = vst [vmem:[#allocation2 + $0x30] sm:$0xff] 0.0
      %113 = vst [vmem:[#allocation2 + $0x38] sm:$0xff] 0.0
      %114 = vst [vmem:[#allocation2 + $0x40] sm:$0xff] 0.0
      %115 = vst [vmem:[#allocation2 + $0x48] sm:$0xff] 0.0
      %116 = vst [vmem:[#allocation2 + $0x50] sm:$0xff] 0.0
      %117 = vst [vmem:[#allocation2 + $0x58] sm:$0xff] 0.0
      %118 = vst [vmem:[#allocation2 + $0x60] sm:$0xff] 0.0
      %119 = vst [vmem:[#allocation2 + $0x68] sm:$0xff] 0.0
      %120 = vst [vmem:[#allocation2 + $0x70] sm:$0xff] 0.0
      %121 = vst [vmem:[#allocation2 + $0x78] sm:$0xff] 0.0
      %vm122 = vcmask 7168
      %123 = vst.msk [vmem:[#allocation3] sm:$0xff] %vm122, 0.0
      %124 = vst.msk [vmem:[#allocation3 + $0x8] sm:$0xff] %vm122, 0.0
      %125 = vst.msk [vmem:[#allocation3 + $0x10] sm:$0xff] %vm122, 0.0
      %126 = vst.msk [vmem:[#allocation3 + $0x18] sm:$0xff] %vm122, 0.0
      %127 = vst.msk [vmem:[#allocation3 + $0x20] sm:$0xff] %vm122, 0.0
      %128 = vst.msk [vmem:[#allocation3 + $0x28] sm:$0xff] %vm122, 0.0
      %129 = vst.msk [vmem:[#allocation3 + $0x30] sm:$0xff] %vm122, 0.0
      %130 = vst.msk [vmem:[#allocation3 + $0x38] sm:$0xff] %vm122, 0.0
      %131 = vst.msk [vmem:[#allocation3 + $0x40] sm:$0xff] %vm122, 0.0
      %132 = vst.msk [vmem:[#allocation3 + $0x48] sm:$0xff] %vm122, 0.0
      %133 = vst.msk [vmem:[#allocation3 + $0x50] sm:$0xff] %vm122, 0.0
      %134 = vst.msk [vmem:[#allocation3 + $0x58] sm:$0xff] %vm122, 0.0
      %135 = vst.msk [vmem:[#allocation3 + $0x60] sm:$0xff] %vm122, 0.0
      %136 = vst.msk [vmem:[#allocation3 + $0x68] sm:$0xff] %vm122, 0.0
      %137 = vst.msk [vmem:[#allocation3 + $0x70] sm:$0xff] %vm122, 0.0
      %138 = vst.msk [vmem:[#allocation3 + $0x78] sm:$0xff] %vm122, 0.0
    $region49: #{tpu_custom_call.1} parent=1 // pred_fallthru
      _
    %v139 = vld [vmem:[#allocation4] sm:$0xf]
    %v140 = vld [vmem:[#allocation4 + $0x4] sm:$0xf]
    %v141 = vld [vmem:[#allocation4 + $0x8] sm:$0xf]
    %v142 = vld [vmem:[#allocation4 + $0xc] sm:$0xf]
    %v143 = vld [vmem:[#allocation4 + $0x10] sm:$0xf]
    %v144 = vld [vmem:[#allocation4 + $0x14] sm:$0xf]
    %v145 = vld [vmem:[#allocation4 + $0x18] sm:$0xf]
    %v146 = vld [vmem:[#allocation4 + $0x1c] sm:$0xf]
    %v147 = vld [vmem:[#allocation4 + $0x20] sm:$0xf]
    %v148 = vld [vmem:[#allocation4 + $0x24] sm:$0xf]
    %v149 = vld [vmem:[#allocation4 + $0x28] sm:$0xf]
    %v150 = vld [vmem:[#allocation4 + $0x2c] sm:$0xf]
    %v151 = vld [vmem:[#allocation4 + $0x30] sm:$0xf]
    %v152 = vld [vmem:[#allocation4 + $0x34] sm:$0xf]
    %v153 = vld [vmem:[#allocation4 + $0x38] sm:$0xf]
    %v154 = vld [vmem:[#allocation4 + $0x3c] sm:$0xf]
    %s155 = smul.u32 0, 128
    %s156 = sshra.s32 %s155, 3
    %s157 = sand.u32 %s155, 7
    %s158 = smul.addr %s156, 4
    %s159 = scalar_lea.vmem [#allocation7], %s158
    %v160 = vld [vmem:[%s159] sm:$0xf]
    %v161 = vld [vmem:[%s159 + $0x4] sm:$0xf]
    %v162 = vld [vmem:[%s159 + $0x8] sm:$0xf]
    %v163 = vld [vmem:[%s159 + $0xc] sm:$0xf]
    %v164 = vld [vmem:[%s159 + $0x10] sm:$0xf]
    %v165 = vld [vmem:[%s159 + $0x14] sm:$0xf]
    %v166 = vld [vmem:[%s159 + $0x18] sm:$0xf]
    %v167 = vld [vmem:[%s159 + $0x1c] sm:$0xf]
    %v168 = vld [vmem:[%s159 + $0x20] sm:$0xf]
    %v169 = vld [vmem:[%s159 + $0x24] sm:$0xf]
    %v170 = vld [vmem:[%s159 + $0x28] sm:$0xf]
    %v171 = vld [vmem:[%s159 + $0x2c] sm:$0xf]
    %v172 = vld [vmem:[%s159 + $0x30] sm:$0xf]
    %v173 = vld [vmem:[%s159 + $0x34] sm:$0xf]
    %v174 = vld [vmem:[%s159 + $0x38] sm:$0xf]
    %v175 = vld [vmem:[%s159 + $0x3c] sm:$0xf]
    %v176 = vld [vmem:[#allocation2] sm:$0xff]
    %v177 = vld [vmem:[#allocation2 + $0x8] sm:$0xff]
    %v178 = vld [vmem:[#allocation2 + $0x10] sm:$0xff]
    %v179 = vld [vmem:[#allocation2 + $0x18] sm:$0xff]
    %v180 = vld [vmem:[#allocation2 + $0x20] sm:$0xff]
    %v181 = vld [vmem:[#allocation2 + $0x28] sm:$0xff]
    %v182 = vld [vmem:[#allocation2 + $0x30] sm:$0xff]
    %v183 = vld [vmem:[#allocation2 + $0x38] sm:$0xff]
    %v184 = vld [vmem:[#allocation2 + $0x40] sm:$0xff]
    %v185 = vld [vmem:[#allocation2 + $0x48] sm:$0xff]
    %v186 = vld [vmem:[#allocation2 + $0x50] sm:$0xff]
    %v187 = vld [vmem:[#allocation2 + $0x58] sm:$0xff]
    %v188 = vld [vmem:[#allocation2 + $0x60] sm:$0xff]
    %v189 = vld [vmem:[#allocation2 + $0x68] sm:$0xff]
    %v190 = vld [vmem:[#allocation2 + $0x70] sm:$0xff]
    %v191 = vld [vmem:[#allocation2 + $0x78] sm:$0xff]
    %v208 = vunpack.c.l.b16 %v139
    %v209 = vunpack.c.l.b16 %v140
    %v210 = vunpack.c.l.b16 %v141
    %v211 = vunpack.c.l.b16 %v142
    %v212 = vunpack.c.l.b16 %v143
    %v213 = vunpack.c.l.b16 %v144
    %v214 = vunpack.c.l.b16 %v145
    %v215 = vunpack.c.l.b16 %v146
    %v216 = vunpack.c.l.b16 %v147
    %v217 = vunpack.c.l.b16 %v148
    %v218 = vunpack.c.l.b16 %v149
    %v219 = vunpack.c.l.b16 %v150
    %v220 = vunpack.c.l.b16 %v151
    %v221 = vunpack.c.l.b16 %v152
    %v222 = vunpack.c.l.b16 %v153
    %v223 = vunpack.c.l.b16 %v154
    %v224 = vpack.c.b16 %v209, %v208
    %v225 = vpack.c.b16 %v211, %v210
    %v226 = vpack.c.b16 %v213, %v212
    %v227 = vpack.c.b16 %v215, %v214
    %v228 = vpack.c.b16 %v217, %v216
    %v229 = vpack.c.b16 %v219, %v218
    %v230 = vpack.c.b16 %v221, %v220
    %v231 = vpack.c.b16 %v223, %v222
    %v256 = vunpack.c.l.b16 %v160
    %v257 = vunpack.c.l.b16 %v161
    %v258 = vunpack.c.l.b16 %v162
    %v259 = vunpack.c.l.b16 %v163
    %v260 = vunpack.c.l.b16 %v164
    %v261 = vunpack.c.l.b16 %v165
    %v262 = vunpack.c.l.b16 %v166
    %v263 = vunpack.c.l.b16 %v167
    %v264 = vunpack.c.l.b16 %v168
    %v265 = vunpack.c.l.b16 %v169
    %v266 = vunpack.c.l.b16 %v170
    %v267 = vunpack.c.l.b16 %v171
    %v268 = vunpack.c.l.b16 %v172
    %v269 = vunpack.c.l.b16 %v173
    %v270 = vunpack.c.l.b16 %v174
    %v271 = vunpack.c.l.b16 %v175
    %v272 = vpack.c.b16 %v257, %v256
    %v273 = vpack.c.b16 %v259, %v258
    %v274 = vpack.c.b16 %v261, %v260
    %v275 = vpack.c.b16 %v263, %v262
    %v276 = vpack.c.b16 %v265, %v264
    %v277 = vpack.c.b16 %v267, %v266
    %v278 = vpack.c.b16 %v269, %v268
    %v279 = vpack.c.b16 %v271, %v270
    %288 = vmatpush.bf16.msra.mxu0 %v279
    %289 = vmatpush.bf16.msra.mxu0 %v278
    %290 = vmatpush.bf16.msra.mxu0 %v277
    %291 = vmatpush.bf16.msra.mxu0 %v276
    %292 = vmatpush.bf16.msra.mxu0 %v275
    %293 = vmatpush.bf16.msra.mxu0 %v274
    %294 = vmatpush.bf16.msra.mxu0 %v273
    %295 = vmatpush.bf16.msra.mxu0 %v272
    %296 = vmatmul.bf16.gmra.mxu0 %v224
    %v297 = vpop.f32.mrf.mxu0
    %v298 = vadd.f32 0.0, %v297
    %v299 = vpop.f32.mrf.mxu0
    %v300 = vadd.f32 0.0, %v299
    %301 = vmatmul.bf16.gmra.mxu0 %v225
    %v302 = vpop.f32.mrf.mxu0
    %v303 = vadd.f32 0.0, %v302
    %v304 = vpop.f32.mrf.mxu0
    %v305 = vadd.f32 0.0, %v304
    %306 = vmatmul.bf16.gmra.mxu0 %v226
    %v307 = vpop.f32.mrf.mxu0
    %v308 = vadd.f32 0.0, %v307
    %v309 = vpop.f32.mrf.mxu0
    %v310 = vadd.f32 0.0, %v309
    %311 = vmatmul.bf16.gmra.mxu0 %v227
    %v312 = vpop.f32.mrf.mxu0
    %v313 = vadd.f32 0.0, %v312
    %v314 = vpop.f32.mrf.mxu0
    %v315 = vadd.f32 0.0, %v314
    %316 = vmatmul.bf16.gmra.mxu0 %v228
    %v317 = vpop.f32.mrf.mxu0
    %v318 = vadd.f32 0.0, %v317
    %v319 = vpop.f32.mrf.mxu0
    %v320 = vadd.f32 0.0, %v319
    %321 = vmatmul.bf16.gmra.mxu0 %v229
    %v322 = vpop.f32.mrf.mxu0
    %v323 = vadd.f32 0.0, %v322
    %v324 = vpop.f32.mrf.mxu0
    %v325 = vadd.f32 0.0, %v324
    %326 = vmatmul.bf16.gmra.mxu0 %v230
    %v327 = vpop.f32.mrf.mxu0
    %v328 = vadd.f32 0.0, %v327
    %v329 = vpop.f32.mrf.mxu0
    %v330 = vadd.f32 0.0, %v329
    %331 = vmatmul.bf16.gmra.mxu0 %v231
    %v332 = vpop.f32.mrf.mxu0
    %v333 = vadd.f32 0.0, %v332
    %v334 = vpop.f32.mrf.mxu0
    %v335 = vadd.f32 0.0, %v334
    %336 = vdwg.mxu0
    %v337 = vadd.f32 %v176, %v298
    %v338 = vadd.f32 %v177, %v300
    %v339 = vadd.f32 %v178, %v303
    %v340 = vadd.f32 %v179, %v305
    %v341 = vadd.f32 %v180, %v308
    %v342 = vadd.f32 %v181, %v310
    %v343 = vadd.f32 %v182, %v313
    %v344 = vadd.f32 %v183, %v315
    %v345 = vadd.f32 %v184, %v318
    %v346 = vadd.f32 %v185, %v320
    %v347 = vadd.f32 %v186, %v323
    %v348 = vadd.f32 %v187, %v325
    %v349 = vadd.f32 %v188, %v328
    %v350 = vadd.f32 %v189, %v330
    %v351 = vadd.f32 %v190, %v333
    %v352 = vadd.f32 %v191, %v335
    %353 = vst [vmem:[#allocation2] sm:$0xff] %v337
    %354 = vst [vmem:[#allocation2 + $0x8] sm:$0xff] %v338
    %355 = vst [vmem:[#allocation2 + $0x10] sm:$0xff] %v339
    %356 = vst [vmem:[#allocation2 + $0x18] sm:$0xff] %v340
    %357 = vst [vmem:[#allocation2 + $0x20] sm:$0xff] %v341
    %358 = vst [vmem:[#allocation2 + $0x28] sm:$0xff] %v342
    %359 = vst [vmem:[#allocation2 + $0x30] sm:$0xff] %v343
    %360 = vst [vmem:[#allocation2 + $0x38] sm:$0xff] %v344
    %361 = vst [vmem:[#allocation2 + $0x40] sm:$0xff] %v345
    %362 = vst [vmem:[#allocation2 + $0x48] sm:$0xff] %v346
    %363 = vst [vmem:[#allocation2 + $0x50] sm:$0xff] %v347
    %364 = vst [vmem:[#allocation2 + $0x58] sm:$0xff] %v348
    %365 = vst [vmem:[#allocation2 + $0x60] sm:$0xff] %v349
    %366 = vst [vmem:[#allocation2 + $0x68] sm:$0xff] %v350
    %367 = vst [vmem:[#allocation2 + $0x70] sm:$0xff] %v351
    %368 = vst [vmem:[#allocation2 + $0x78] sm:$0xff] %v352
    %v369 = vld [vmem:[#allocation3] sm:$0xff]
    %v370 = vld [vmem:[#allocation3 + $0x8] sm:$0xff]
    %v371 = vld [vmem:[#allocation3 + $0x10] sm:$0xff]
    %v372 = vld [vmem:[#allocation3 + $0x18] sm:$0xff]
    %v373 = vld [vmem:[#allocation3 + $0x20] sm:$0xff]
    %v374 = vld [vmem:[#allocation3 + $0x28] sm:$0xff]
    %v375 = vld [vmem:[#allocation3 + $0x30] sm:$0xff]
    %v376 = vld [vmem:[#allocation3 + $0x38] sm:$0xff]
    %v377 = vld [vmem:[#allocation3 + $0x40] sm:$0xff]
    %v378 = vld [vmem:[#allocation3 + $0x48] sm:$0xff]
    %v379 = vld [vmem:[#allocation3 + $0x50] sm:$0xff]
    %v380 = vld [vmem:[#allocation3 + $0x58] sm:$0xff]
    %v381 = vld [vmem:[#allocation3 + $0x60] sm:$0xff]
    %v382 = vld [vmem:[#allocation3 + $0x68] sm:$0xff]
    %v383 = vld [vmem:[#allocation3 + $0x70] sm:$0xff]
    %v384 = vld [vmem:[#allocation3 + $0x78] sm:$0xff]
    %v385 = vunpack.c.l.bf16 %v139
    %v386 = vunpack.c.l.bf16 %v140
    %v387 = vunpack.c.l.bf16 %v141
    %v388 = vunpack.c.l.bf16 %v142
    %v389 = vunpack.c.l.bf16 %v143
    %v390 = vunpack.c.l.bf16 %v144
    %v391 = vunpack.c.l.bf16 %v145
    %v392 = vunpack.c.l.bf16 %v146
    %v393 = vunpack.c.l.bf16 %v147
    %v394 = vunpack.c.l.bf16 %v148
    %v395 = vunpack.c.l.bf16 %v149
    %v396 = vunpack.c.l.bf16 %v150
    %v397 = vunpack.c.l.bf16 %v151
    %v398 = vunpack.c.l.bf16 %v152
    %v399 = vunpack.c.l.bf16 %v153
    %v400 = vunpack.c.l.bf16 %v154
    %401 = vadd.xlane.f32.xlu0 %v385
    %v402 = vpop.xlane.xlu0 %401
    %403 = vadd.xlane.f32.xlu0 %v386
    %v404 = vpop.xlane.xlu0 %403
    %405 = vadd.xlane.f32.xlu0 %v387
    %v406 = vpop.xlane.xlu0 %405
    %407 = vadd.xlane.f32.xlu0 %v388
    %v408 = vpop.xlane.xlu0 %407
    %409 = vadd.xlane.f32.xlu0 %v389
    %v410 = vpop.xlane.xlu0 %409
    %411 = vadd.xlane.f32.xlu0 %v390
    %v412 = vpop.xlane.xlu0 %411
    %413 = vadd.xlane.f32.xlu0 %v391
    %v414 = vpop.xlane.xlu0 %413
    %415 = vadd.xlane.f32.xlu0 %v392
    %v416 = vpop.xlane.xlu0 %415
    %417 = vadd.xlane.f32.xlu0 %v393
    %v418 = vpop.xlane.xlu0 %417
    %419 = vadd.xlane.f32.xlu0 %v394
    %v420 = vpop.xlane.xlu0 %419
    %421 = vadd.xlane.f32.xlu0 %v395
    %v422 = vpop.xlane.xlu0 %421
    %423 = vadd.xlane.f32.xlu0 %v396
    %v424 = vpop.xlane.xlu0 %423
    %425 = vadd.xlane.f32.xlu0 %v397
    %v426 = vpop.xlane.xlu0 %425
    %427 = vadd.xlane.f32.xlu0 %v398
    %v428 = vpop.xlane.xlu0 %427
    %429 = vadd.xlane.f32.xlu0 %v399
    %v430 = vpop.xlane.xlu0 %429
    %431 = vadd.xlane.f32.xlu0 %v400
    %v432 = vpop.xlane.xlu0 %431
    %v433 = vadd.f32 %v369, %v402
    %v434 = vadd.f32 %v370, %v404
    %v435 = vadd.f32 %v371, %v406
    %v436 = vadd.f32 %v372, %v408
    %v437 = vadd.f32 %v373, %v410
    %v438 = vadd.f32 %v374, %v412
    %v439 = vadd.f32 %v375, %v414
    %v440 = vadd.f32 %v376, %v416
    %v441 = vadd.f32 %v377, %v418
    %v442 = vadd.f32 %v378, %v420
    %v443 = vadd.f32 %v379, %v422
    %v444 = vadd.f32 %v380, %v424
    %v445 = vadd.f32 %v381, %v426
    %v446 = vadd.f32 %v382, %v428
    %v447 = vadd.f32 %v383, %v430
    %v448 = vadd.f32 %v384, %v432
    %vm449 = vcmask 7168
    %450 = vst.msk [vmem:[#allocation3] sm:$0xff] %vm449, %v433
    %451 = vst.msk [vmem:[#allocation3 + $0x8] sm:$0xff] %vm449, %v434
    %452 = vst.msk [vmem:[#allocation3 + $0x10] sm:$0xff] %vm449, %v435
    %453 = vst.msk [vmem:[#allocation3 + $0x18] sm:$0xff] %vm449, %v436
    %454 = vst.msk [vmem:[#allocation3 + $0x20] sm:$0xff] %vm449, %v437
    %455 = vst.msk [vmem:[#allocation3 + $0x28] sm:$0xff] %vm449, %v438
    %456 = vst.msk [vmem:[#allocation3 + $0x30] sm:$0xff] %vm449, %v439
    %457 = vst.msk [vmem:[#allocation3 + $0x38] sm:$0xff] %vm449, %v440
    %458 = vst.msk [vmem:[#allocation3 + $0x40] sm:$0xff] %vm449, %v441
    %459 = vst.msk [vmem:[#allocation3 + $0x48] sm:$0xff] %vm449, %v442
    %460 = vst.msk [vmem:[#allocation3 + $0x50] sm:$0xff] %vm449, %v443
    %461 = vst.msk [vmem:[#allocation3 + $0x58] sm:$0xff] %vm449, %v444
    %462 = vst.msk [vmem:[#allocation3 + $0x60] sm:$0xff] %vm449, %v445
    %463 = vst.msk [vmem:[#allocation3 + $0x68] sm:$0xff] %vm449, %v446
    %464 = vst.msk [vmem:[#allocation3 + $0x70] sm:$0xff] %vm449, %v447
    %465 = vst.msk [vmem:[#allocation3 + $0x78] sm:$0xff] %vm449, %v448
    // Predicated region
    $region50: #{tpu_custom_call.1} parent=1 // pred_check
      %p466 = pneg %p102
    $region51: #{tpu_custom_call.1} parent=1 // pred_check_branch
      %468 = sbr.rel (%p466) target = $region53
    $region52: #{tpu_custom_call.1} parent=1 // pred_region
      %v469 = vld [vmem:[#allocation3] sm:$0xff]
      %v470 = vld [vmem:[#allocation3 + $0x8] sm:$0xff]
      %v471 = vld [vmem:[#allocation3 + $0x10] sm:$0xff]
      %v472 = vld [vmem:[#allocation3 + $0x18] sm:$0xff]
      %v473 = vld [vmem:[#allocation3 + $0x20] sm:$0xff]
      %v474 = vld [vmem:[#allocation3 + $0x28] sm:$0xff]
      %v475 = vld [vmem:[#allocation3 + $0x30] sm:$0xff]
      %v476 = vld [vmem:[#allocation3 + $0x38] sm:$0xff]
      %v477 = vld [vmem:[#allocation3 + $0x40] sm:$0xff]
      %v478 = vld [vmem:[#allocation3 + $0x48] sm:$0xff]
      %v479 = vld [vmem:[#allocation3 + $0x50] sm:$0xff]
      %v480 = vld [vmem:[#allocation3 + $0x58] sm:$0xff]
      %v481 = vld [vmem:[#allocation3 + $0x60] sm:$0xff]
      %v482 = vld [vmem:[#allocation3 + $0x68] sm:$0xff]
      %v483 = vld [vmem:[#allocation3 + $0x70] sm:$0xff]
      %v484 = vld [vmem:[#allocation3 + $0x78] sm:$0xff]
      %vm485 = vcmp.gt.f32.partialorder %v469, 0.0
      %vm486 = vcmp.gt.f32.partialorder %v470, 0.0
      %vm487 = vcmp.gt.f32.partialorder %v471, 0.0
      %vm488 = vcmp.gt.f32.partialorder %v472, 0.0
      %vm489 = vcmp.gt.f32.partialorder %v473, 0.0
      %vm490 = vcmp.gt.f32.partialorder %v474, 0.0
      %vm491 = vcmp.gt.f32.partialorder %v475, 0.0
      %vm492 = vcmp.gt.f32.partialorder %v476, 0.0
      %vm493 = vcmp.gt.f32.partialorder %v477, 0.0
      %vm494 = vcmp.gt.f32.partialorder %v478, 0.0
      %vm495 = vcmp.gt.f32.partialorder %v479, 0.0
      %vm496 = vcmp.gt.f32.partialorder %v480, 0.0
      %vm497 = vcmp.gt.f32.partialorder %v481, 0.0
      %vm498 = vcmp.gt.f32.partialorder %v482, 0.0
      %vm499 = vcmp.gt.f32.partialorder %v483, 0.0
      %vm500 = vcmp.gt.f32.partialorder %v484, 0.0
      %v501 = vmax.f32 %v469, 1.0
      %v502 = vmax.f32 %v470, 1.0
      %v503 = vmax.f32 %v471, 1.0
      %v504 = vmax.f32 %v472, 1.0
      %v505 = vmax.f32 %v473, 1.0
      %v506 = vmax.f32 %v474, 1.0
      %v507 = vmax.f32 %v475, 1.0
      %v508 = vmax.f32 %v476, 1.0
      %v509 = vmax.f32 %v477, 1.0
      %v510 = vmax.f32 %v478, 1.0
      %v511 = vmax.f32 %v479, 1.0
      %v512 = vmax.f32 %v480, 1.0
      %v513 = vmax.f32 %v481, 1.0
      %v514 = vmax.f32 %v482, 1.0
      %v515 = vmax.f32 %v483, 1.0
      %v516 = vmax.f32 %v484, 1.0
      %v517 = vrcp.pop %v501
      %v518 = vmul.f32 %v501, %v517
      %v519 = vsub.f32 1.0, %v518
      %v520 = vmul.f32 %v517, %v519
      %v521 = vadd.f32 %v517, %v520
      %vm522 = vweird.f32 %v501
      %vm523 = vweird.f32 %v517
      %vm524 = vmor %vm522, %vm523
      %v525 = vsel %vm524, %v517, %v521
      %v526 = vand.u32 2147483647, %v501
      %vm527 = vcmp.eq.f32.partialorder %v526, 8.507059e+37
      %v528 = vand.u32 %v501, 2147483648
      %v529 = vor.u32 1.1754944e-38, %v528
      %v530 = vsel %vm527, %v529, %v525
      %v531 = vmul.f32 1.0, %v530
      %v532 = vrcp.pop %v502
      %v533 = vmul.f32 %v502, %v532
      %v534 = vsub.f32 1.0, %v533
      %v535 = vmul.f32 %v532, %v534
      %v536 = vadd.f32 %v532, %v535
      %vm537 = vweird.f32 %v502
      %vm538 = vweird.f32 %v532
      %vm539 = vmor %vm537, %vm538
      %v540 = vsel %vm539, %v532, %v536
      %v541 = vand.u32 2147483647, %v502
      %vm542 = vcmp.eq.f32.partialorder %v541, 8.507059e+37
      %v543 = vand.u32 %v502, 2147483648
      %v544 = vor.u32 1.1754944e-38, %v543
      %v545 = vsel %vm542, %v544, %v540
      %v546 = vmul.f32 1.0, %v545
      %v547 = vrcp.pop %v503
      %v548 = vmul.f32 %v503, %v547
      %v549 = vsub.f32 1.0, %v548
      %v550 = vmul.f32 %v547, %v549
      %v551 = vadd.f32 %v547, %v550
      %vm552 = vweird.f32 %v503
      %vm553 = vweird.f32 %v547
      %vm554 = vmor %vm552, %vm553
      %v555 = vsel %vm554, %v547, %v551
      %v556 = vand.u32 2147483647, %v503
      %vm557 = vcmp.eq.f32.partialorder %v556, 8.507059e+37
      %v558 = vand.u32 %v503, 2147483648
      %v559 = vor.u32 1.1754944e-38, %v558
      %v560 = vsel %vm557, %v559, %v555
      %v561 = vmul.f32 1.0, %v560
      %v562 = vrcp.pop %v504
      %v563 = vmul.f32 %v504, %v562
      %v564 = vsub.f32 1.0, %v563
      %v565 = vmul.f32 %v562, %v564
      %v566 = vadd.f32 %v562, %v565
      %vm567 = vweird.f32 %v504
      %vm568 = vweird.f32 %v562
      %vm569 = vmor %vm567, %vm568
      %v570 = vsel %vm569, %v562, %v566
      %v571 = vand.u32 2147483647, %v504
      %vm572 = vcmp.eq.f32.partialorder %v571, 8.507059e+37
      %v573 = vand.u32 %v504, 2147483648
      %v574 = vor.u32 1.1754944e-38, %v573
      %v575 = vsel %vm572, %v574, %v570
      %v576 = vmul.f32 1.0, %v575
      %v577 = vrcp.pop %v505
      %v578 = vmul.f32 %v505, %v577
      %v579 = vsub.f32 1.0, %v578
      %v580 = vmul.f32 %v577, %v579
      %v581 = vadd.f32 %v577, %v580
      %vm582 = vweird.f32 %v505
      %vm583 = vweird.f32 %v577
      %vm584 = vmor %vm582, %vm583
      %v585 = vsel %vm584, %v577, %v581
      %v586 = vand.u32 2147483647, %v505
      %vm587 = vcmp.eq.f32.partialorder %v586, 8.507059e+37
      %v588 = vand.u32 %v505, 2147483648
      %v589 = vor.u32 1.1754944e-38, %v588
      %v590 = vsel %vm587, %v589, %v585
      %v591 = vmul.f32 1.0, %v590
      %v592 = vrcp.pop %v506
      %v593 = vmul.f32 %v506, %v592
      %v594 = vsub.f32 1.0, %v593
      %v595 = vmul.f32 %v592, %v594
      %v596 = vadd.f32 %v592, %v595
      %vm597 = vweird.f32 %v506
      %vm598 = vweird.f32 %v592
      %vm599 = vmor %vm597, %vm598
      %v600 = vsel %vm599, %v592, %v596
      %v601 = vand.u32 2147483647, %v506
      %vm602 = vcmp.eq.f32.partialorder %v601, 8.507059e+37
      %v603 = vand.u32 %v506, 2147483648
      %v604 = vor.u32 1.1754944e-38, %v603
      %v605 = vsel %vm602, %v604, %v600
      %v606 = vmul.f32 1.0, %v605
      %v607 = vrcp.pop %v507
      %v608 = vmul.f32 %v507, %v607
      %v609 = vsub.f32 1.0, %v608
      %v610 = vmul.f32 %v607, %v609
      %v611 = vadd.f32 %v607, %v610
      %vm612 = vweird.f32 %v507
      %vm613 = vweird.f32 %v607
      %vm614 = vmor %vm612, %vm613
      %v615 = vsel %vm614, %v607, %v611
      %v616 = vand.u32 2147483647, %v507
      %vm617 = vcmp.eq.f32.partialorder %v616, 8.507059e+37
      %v618 = vand.u32 %v507, 2147483648
      %v619 = vor.u32 1.1754944e-38, %v618
      %v620 = vsel %vm617, %v619, %v615
      %v621 = vmul.f32 1.0, %v620
      %v622 = vrcp.pop %v508
      %v623 = vmul.f32 %v508, %v622
      %v624 = vsub.f32 1.0, %v623
      %v625 = vmul.f32 %v622, %v624
      %v626 = vadd.f32 %v622, %v625
      %vm627 = vweird.f32 %v508
      %vm628 = vweird.f32 %v622
      %vm629 = vmor %vm627, %vm628
      %v630 = vsel %vm629, %v622, %v626
      %v631 = vand.u32 2147483647, %v508
      %vm632 = vcmp.eq.f32.partialorder %v631, 8.507059e+37
      %v633 = vand.u32 %v508, 2147483648
      %v634 = vor.u32 1.1754944e-38, %v633
      %v635 = vsel %vm632, %v634, %v630
      %v636 = vmul.f32 1.0, %v635
      %v637 = vrcp.pop %v509
      %v638 = vmul.f32 %v509, %v637
      %v639 = vsub.f32 1.0, %v638
      %v640 = vmul.f32 %v637, %v639
      %v641 = vadd.f32 %v637, %v640
      %vm642 = vweird.f32 %v509
      %vm643 = vweird.f32 %v637
      %vm644 = vmor %vm642, %vm643
      %v645 = vsel %vm644, %v637, %v641
      %v646 = vand.u32 2147483647, %v509
      %vm647 = vcmp.eq.f32.partialorder %v646, 8.507059e+37
      %v648 = vand.u32 %v509, 2147483648
      %v649 = vor.u32 1.1754944e-38, %v648
      %v650 = vsel %vm647, %v649, %v645
      %v651 = vmul.f32 1.0, %v650
      %v652 = vrcp.pop %v510
      %v653 = vmul.f32 %v510, %v652
      %v654 = vsub.f32 1.0, %v653
      %v655 = vmul.f32 %v652, %v654
      %v656 = vadd.f32 %v652, %v655
      %vm657 = vweird.f32 %v510
      %vm658 = vweird.f32 %v652
      %vm659 = vmor %vm657, %vm658
      %v660 = vsel %vm659, %v652, %v656
      %v661 = vand.u32 2147483647, %v510
      %vm662 = vcmp.eq.f32.partialorder %v661, 8.507059e+37
      %v663 = vand.u32 %v510, 2147483648
      %v664 = vor.u32 1.1754944e-38, %v663
      %v665 = vsel %vm662, %v664, %v660
      %v666 = vmul.f32 1.0, %v665
      %v667 = vrcp.pop %v511
      %v668 = vmul.f32 %v511, %v667
      %v669 = vsub.f32 1.0, %v668
      %v670 = vmul.f32 %v667, %v669
      %v671 = vadd.f32 %v667, %v670
      %vm672 = vweird.f32 %v511
      %vm673 = vweird.f32 %v667
      %vm674 = vmor %vm672, %vm673
      %v675 = vsel %vm674, %v667, %v671
      %v676 = vand.u32 2147483647, %v511
      %vm677 = vcmp.eq.f32.partialorder %v676, 8.507059e+37
      %v678 = vand.u32 %v511, 2147483648
      %v679 = vor.u32 1.1754944e-38, %v678
      %v680 = vsel %vm677, %v679, %v675
      %v681 = vmul.f32 1.0, %v680
      %v682 = vrcp.pop %v512
      %v683 = vmul.f32 %v512, %v682
      %v684 = vsub.f32 1.0, %v683
      %v685 = vmul.f32 %v682, %v684
      %v686 = vadd.f32 %v682, %v685
      %vm687 = vweird.f32 %v512
      %vm688 = vweird.f32 %v682
      %vm689 = vmor %vm687, %vm688
      %v690 = vsel %vm689, %v682, %v686
      %v691 = vand.u32 2147483647, %v512
      %vm692 = vcmp.eq.f32.partialorder %v691, 8.507059e+37
      %v693 = vand.u32 %v512, 2147483648
      %v694 = vor.u32 1.1754944e-38, %v693
      %v695 = vsel %vm692, %v694, %v690
      %v696 = vmul.f32 1.0, %v695
      %v697 = vrcp.pop %v513
      %v698 = vmul.f32 %v513, %v697
      %v699 = vsub.f32 1.0, %v698
      %v700 = vmul.f32 %v697, %v699
      %v701 = vadd.f32 %v697, %v700
      %vm702 = vweird.f32 %v513
      %vm703 = vweird.f32 %v697
      %vm704 = vmor %vm702, %vm703
      %v705 = vsel %vm704, %v697, %v701
      %v706 = vand.u32 2147483647, %v513
      %vm707 = vcmp.eq.f32.partialorder %v706, 8.507059e+37
      %v708 = vand.u32 %v513, 2147483648
      %v709 = vor.u32 1.1754944e-38, %v708
      %v710 = vsel %vm707, %v709, %v705
      %v711 = vmul.f32 1.0, %v710
      %v712 = vrcp.pop %v514
      %v713 = vmul.f32 %v514, %v712
      %v714 = vsub.f32 1.0, %v713
      %v715 = vmul.f32 %v712, %v714
      %v716 = vadd.f32 %v712, %v715
      %vm717 = vweird.f32 %v514
      %vm718 = vweird.f32 %v712
      %vm719 = vmor %vm717, %vm718
      %v720 = vsel %vm719, %v712, %v716
      %v721 = vand.u32 2147483647, %v514
      %vm722 = vcmp.eq.f32.partialorder %v721, 8.507059e+37
      %v723 = vand.u32 %v514, 2147483648
      %v724 = vor.u32 1.1754944e-38, %v723
      %v725 = vsel %vm722, %v724, %v720
      %v726 = vmul.f32 1.0, %v725
      %v727 = vrcp.pop %v515
      %v728 = vmul.f32 %v515, %v727
      %v729 = vsub.f32 1.0, %v728
      %v730 = vmul.f32 %v727, %v729
      %v731 = vadd.f32 %v727, %v730
      %vm732 = vweird.f32 %v515
      %vm733 = vweird.f32 %v727
      %vm734 = vmor %vm732, %vm733
      %v735 = vsel %vm734, %v727, %v731
      %v736 = vand.u32 2147483647, %v515
      %vm737 = vcmp.eq.f32.partialorder %v736, 8.507059e+37
      %v738 = vand.u32 %v515, 2147483648
      %v739 = vor.u32 1.1754944e-38, %v738
      %v740 = vsel %vm737, %v739, %v735
      %v741 = vmul.f32 1.0, %v740
      %v742 = vrcp.pop %v516
      %v743 = vmul.f32 %v516, %v742
      %v744 = vsub.f32 1.0, %v743
      %v745 = vmul.f32 %v742, %v744
      %v746 = vadd.f32 %v742, %v745
      %vm747 = vweird.f32 %v516
      %vm748 = vweird.f32 %v742
      %vm749 = vmor %vm747, %vm748
      %v750 = vsel %vm749, %v742, %v746
      %v751 = vand.u32 2147483647, %v516
      %vm752 = vcmp.eq.f32.partialorder %v751, 8.507059e+37
      %v753 = vand.u32 %v516, 2147483648
      %v754 = vor.u32 1.1754944e-38, %v753
      %v755 = vsel %vm752, %v754, %v750
      %v756 = vmul.f32 1.0, %v755
      %v757 = vsel %vm485, %v531, 0.0
      %v758 = vsel %vm486, %v546, 0.0
      %v759 = vsel %vm487, %v561, 0.0
      %v760 = vsel %vm488, %v576, 0.0
      %v761 = vsel %vm489, %v591, 0.0
      %v762 = vsel %vm490, %v606, 0.0
      %v763 = vsel %vm491, %v621, 0.0
      %v764 = vsel %vm492, %v636, 0.0
      %v765 = vsel %vm493, %v651, 0.0
      %v766 = vsel %vm494, %v666, 0.0
      %v767 = vsel %vm495, %v681, 0.0
      %v768 = vsel %vm496, %v696, 0.0
      %v769 = vsel %vm497, %v711, 0.0
      %v770 = vsel %vm498, %v726, 0.0
      %v771 = vsel %vm499, %v741, 0.0
      %v772 = vsel %vm500, %v756, 0.0
      %v773 = vld [vmem:[#allocation2] sm:$0xff]
      %v774 = vld [vmem:[#allocation2 + $0x8] sm:$0xff]
      %v775 = vld [vmem:[#allocation2 + $0x10] sm:$0xff]
      %v776 = vld [vmem:[#allocation2 + $0x18] sm:$0xff]
      %v777 = vld [vmem:[#allocation2 + $0x20] sm:$0xff]
      %v778 = vld [vmem:[#allocation2 + $0x28] sm:$0xff]
      %v779 = vld [vmem:[#allocation2 + $0x30] sm:$0xff]
      %v780 = vld [vmem:[#allocation2 + $0x38] sm:$0xff]
      %v781 = vld [vmem:[#allocation2 + $0x40] sm:$0xff]
      %v782 = vld [vmem:[#allocation2 + $0x48] sm:$0xff]
      %v783 = vld [vmem:[#allocation2 + $0x50] sm:$0xff]
      %v784 = vld [vmem:[#allocation2 + $0x58] sm:$0xff]
      %v785 = vld [vmem:[#allocation2 + $0x60] sm:$0xff]
      %v786 = vld [vmem:[#allocation2 + $0x68] sm:$0xff]
      %v787 = vld [vmem:[#allocation2 + $0x70] sm:$0xff]
      %v788 = vld [vmem:[#allocation2 + $0x78] sm:$0xff]
      %790 = vset.pattern.permute.xlu0 0
      %791 = vperm.xlu0 %790, %v757
      %v792 = vpop.permute.xlu0 %791
      %795 = vset.pattern.permute.xlu0 0
      %796 = vperm.xlu0 %795, %v758
      %v797 = vpop.permute.xlu0 %796
      %800 = vset.pattern.permute.xlu0 0
      %801 = vperm.xlu0 %800, %v759
      %v802 = vpop.permute.xlu0 %801
      %805 = vset.pattern.permute.xlu0 0
      %806 = vperm.xlu0 %805, %v760
      %v807 = vpop.permute.xlu0 %806
      %810 = vset.pattern.permute.xlu0 0
      %811 = vperm.xlu0 %810, %v761
      %v812 = vpop.permute.xlu0 %811
      %815 = vset.pattern.permute.xlu0 0
      %816 = vperm.xlu0 %815, %v762
      %v817 = vpop.permute.xlu0 %816
      %820 = vset.pattern.permute.xlu0 0
      %821 = vperm.xlu0 %820, %v763
      %v822 = vpop.permute.xlu0 %821
      %825 = vset.pattern.permute.xlu0 0
      %826 = vperm.xlu0 %825, %v764
      %v827 = vpop.permute.xlu0 %826
      %830 = vset.pattern.permute.xlu0 0
      %831 = vperm.xlu0 %830, %v765
      %v832 = vpop.permute.xlu0 %831
      %835 = vset.pattern.permute.xlu0 0
      %836 = vperm.xlu0 %835, %v766
      %v837 = vpop.permute.xlu0 %836
      %840 = vset.pattern.permute.xlu0 0
      %841 = vperm.xlu0 %840, %v767
      %v842 = vpop.permute.xlu0 %841
      %845 = vset.pattern.permute.xlu0 0
      %846 = vperm.xlu0 %845, %v768
      %v847 = vpop.permute.xlu0 %846
      %850 = vset.pattern.permute.xlu0 0
      %851 = vperm.xlu0 %850, %v769
      %v852 = vpop.permute.xlu0 %851
      %855 = vset.pattern.permute.xlu0 0
      %856 = vperm.xlu0 %855, %v770
      %v857 = vpop.permute.xlu0 %856
      %860 = vset.pattern.permute.xlu0 0
      %861 = vperm.xlu0 %860, %v771
      %v862 = vpop.permute.xlu0 %861
      %865 = vset.pattern.permute.xlu0 0
      %866 = vperm.xlu0 %865, %v772
      %v867 = vpop.permute.xlu0 %866
      %v869 = vmul.f32 %v773, %v792
      %v870 = vmul.f32 %v774, %v797
      %v871 = vmul.f32 %v775, %v802
      %v872 = vmul.f32 %v776, %v807
      %v873 = vmul.f32 %v777, %v812
      %v874 = vmul.f32 %v778, %v817
      %v875 = vmul.f32 %v779, %v822
      %v876 = vmul.f32 %v780, %v827
      %v877 = vmul.f32 %v781, %v832
      %v878 = vmul.f32 %v782, %v837
      %v879 = vmul.f32 %v783, %v842
      %v880 = vmul.f32 %v784, %v847
      %v881 = vmul.f32 %v785, %v852
      %v882 = vmul.f32 %v786, %v857
      %v883 = vmul.f32 %v787, %v862
      %v884 = vmul.f32 %v788, %v867
      %v885 = vpack.c.bf16 %v870, %v869
      %v886 = vpack.c.bf16 %v872, %v871
      %v887 = vpack.c.bf16 %v874, %v873
      %v888 = vpack.c.bf16 %v876, %v875
      %v889 = vpack.c.bf16 %v878, %v877
      %v890 = vpack.c.bf16 %v880, %v879
      %v891 = vpack.c.bf16 %v882, %v881
      %v892 = vpack.c.bf16 %v884, %v883
      %v893 = vld [vmem:[#allocation9] sm:$0xf]
      %v894 = vld [vmem:[#allocation9 + $0x4] sm:$0xf]
      %v895 = vld [vmem:[#allocation9 + $0x8] sm:$0xf]
      %v896 = vld [vmem:[#allocation9 + $0xc] sm:$0xf]
      %v897 = vld [vmem:[#allocation9 + $0x10] sm:$0xf]
      %v898 = vld [vmem:[#allocation9 + $0x14] sm:$0xf]
      %v899 = vld [vmem:[#allocation9 + $0x18] sm:$0xf]
      %v900 = vld [vmem:[#allocation9 + $0x1c] sm:$0xf]
      %v901 = vld [vmem:[#allocation9 + $0x20] sm:$0xf]
      %v902 = vld [vmem:[#allocation9 + $0x24] sm:$0xf]
      %v903 = vld [vmem:[#allocation9 + $0x28] sm:$0xf]
      %v904 = vld [vmem:[#allocation9 + $0x2c] sm:$0xf]
      %v905 = vld [vmem:[#allocation9 + $0x30] sm:$0xf]
      %v906 = vld [vmem:[#allocation9 + $0x34] sm:$0xf]
      %v907 = vld [vmem:[#allocation9 + $0x38] sm:$0xf]
      %v908 = vld [vmem:[#allocation9 + $0x3c] sm:$0xf]
      %v909 = vld [vmem:[#allocation10] sm:$0xf]
      %v910 = vld [vmem:[#allocation10 + $0x4] sm:$0xf]
      %v911 = vld [vmem:[#allocation10 + $0x8] sm:$0xf]
      %v912 = vld [vmem:[#allocation10 + $0xc] sm:$0xf]
      %v913 = vld [vmem:[#allocation10 + $0x10] sm:$0xf]
      %v914 = vld [vmem:[#allocation10 + $0x14] sm:$0xf]
      %v915 = vld [vmem:[#allocation10 + $0x18] sm:$0xf]
      %v916 = vld [vmem:[#allocation10 + $0x1c] sm:$0xf]
      %v917 = vld [vmem:[#allocation10 + $0x20] sm:$0xf]
      %v918 = vld [vmem:[#allocation10 + $0x24] sm:$0xf]
      %v919 = vld [vmem:[#allocation10 + $0x28] sm:$0xf]
      %v920 = vld [vmem:[#allocation10 + $0x2c] sm:$0xf]
      %v921 = vld [vmem:[#allocation10 + $0x30] sm:$0xf]
      %v922 = vld [vmem:[#allocation10 + $0x34] sm:$0xf]
      %v923 = vld [vmem:[#allocation10 + $0x38] sm:$0xf]
      %v924 = vld [vmem:[#allocation10 + $0x3c] sm:$0xf]
      %v925 = vld [vmem:[#allocation12] sm:$0xf]
      %v926 = vld [vmem:[#allocation12 + $0x4] sm:$0xf]
      %v927 = vld [vmem:[#allocation12 + $0x8] sm:$0xf]
      %v928 = vld [vmem:[#allocation12 + $0xc] sm:$0xf]
      %v929 = vld [vmem:[#allocation12 + $0x10] sm:$0xf]
      %v930 = vld [vmem:[#allocation12 + $0x14] sm:$0xf]
      %v931 = vld [vmem:[#allocation12 + $0x18] sm:$0xf]
      %v932 = vld [vmem:[#allocation12 + $0x1c] sm:$0xf]
      %v933 = vld [vmem:[#allocation12 + $0x20] sm:$0xf]
      %v934 = vld [vmem:[#allocation12 + $0x24] sm:$0xf]
      %v935 = vld [vmem:[#allocation12 + $0x28] sm:$0xf]
      %v936 = vld [vmem:[#allocation12 + $0x2c] sm:$0xf]
      %v937 = vld [vmem:[#allocation12 + $0x30] sm:$0xf]
      %v938 = vld [vmem:[#allocation12 + $0x34] sm:$0xf]
      %v939 = vld [vmem:[#allocation12 + $0x38] sm:$0xf]
      %v940 = vld [vmem:[#allocation12 + $0x3c] sm:$0xf]
      %v957 = vunpack.c.l.b16 %v925
      %v958 = vunpack.c.l.b16 %v926
      %v959 = vunpack.c.l.b16 %v927
      %v960 = vunpack.c.l.b16 %v928
      %v961 = vunpack.c.l.b16 %v929
      %v962 = vunpack.c.l.b16 %v930
      %v963 = vunpack.c.l.b16 %v931
      %v964 = vunpack.c.l.b16 %v932
      %v965 = vunpack.c.l.b16 %v933
      %v966 = vunpack.c.l.b16 %v934
      %v967 = vunpack.c.l.b16 %v935
      %v968 = vunpack.c.l.b16 %v936
      %v969 = vunpack.c.l.b16 %v937
      %v970 = vunpack.c.l.b16 %v938
      %v971 = vunpack.c.l.b16 %v939
      %v972 = vunpack.c.l.b16 %v940
      %v973 = vpack.c.b16 %v958, %v957
      %v974 = vpack.c.b16 %v960, %v959
      %v975 = vpack.c.b16 %v962, %v961
      %v976 = vpack.c.b16 %v964, %v963
      %v977 = vpack.c.b16 %v966, %v965
      %v978 = vpack.c.b16 %v968, %v967
      %v979 = vpack.c.b16 %v970, %v969
      %v980 = vpack.c.b16 %v972, %v971
      %989 = vmatpush.bf16.msra.mxu0 %v980
      %990 = vmatpush.bf16.msra.mxu0 %v979
      %991 = vmatpush.bf16.msra.mxu0 %v978
      %992 = vmatpush.bf16.msra.mxu0 %v977
      %993 = vmatpush.bf16.msra.mxu0 %v976
      %994 = vmatpush.bf16.msra.mxu0 %v975
      %995 = vmatpush.bf16.msra.mxu0 %v974
      %996 = vmatpush.bf16.msra.mxu0 %v973
      %997 = vmatmul.bf16.gmra.mxu0 %v885
      %v998 = vpop.f32.mrf.mxu0
      %v999 = vadd.f32 0.0, %v998
      %v1000 = vpop.f32.mrf.mxu0
      %v1001 = vadd.f32 0.0, %v1000
      %1002 = vmatmul.bf16.gmra.mxu0 %v886
      %v1003 = vpop.f32.mrf.mxu0
      %v1004 = vadd.f32 0.0, %v1003
      %v1005 = vpop.f32.mrf.mxu0
      %v1006 = vadd.f32 0.0, %v1005
      %1007 = vmatmul.bf16.gmra.mxu0 %v887
      %v1008 = vpop.f32.mrf.mxu0
      %v1009 = vadd.f32 0.0, %v1008
      %v1010 = vpop.f32.mrf.mxu0
      %v1011 = vadd.f32 0.0, %v1010
      %1012 = vmatmul.bf16.gmra.mxu0 %v888
      %v1013 = vpop.f32.mrf.mxu0
      %v1014 = vadd.f32 0.0, %v1013
      %v1015 = vpop.f32.mrf.mxu0
      %v1016 = vadd.f32 0.0, %v1015
      %1017 = vmatmul.bf16.gmra.mxu0 %v889
      %v1018 = vpop.f32.mrf.mxu0
      %v1019 = vadd.f32 0.0, %v1018
      %v1020 = vpop.f32.mrf.mxu0
      %v1021 = vadd.f32 0.0, %v1020
      %1022 = vmatmul.bf16.gmra.mxu0 %v890
      %v1023 = vpop.f32.mrf.mxu0
      %v1024 = vadd.f32 0.0, %v1023
      %v1025 = vpop.f32.mrf.mxu0
      %v1026 = vadd.f32 0.0, %v1025
      %1027 = vmatmul.bf16.gmra.mxu0 %v891
      %v1028 = vpop.f32.mrf.mxu0
      %v1029 = vadd.f32 0.0, %v1028
      %v1030 = vpop.f32.mrf.mxu0
      %v1031 = vadd.f32 0.0, %v1030
      %1032 = vmatmul.bf16.gmra.mxu0 %v892
      %v1033 = vpop.f32.mrf.mxu0
      %v1034 = vadd.f32 0.0, %v1033
      %v1035 = vpop.f32.mrf.mxu0
      %v1036 = vadd.f32 0.0, %v1035
      %1037 = vdwg.mxu0
      %v1054 = vunpack.c.l.b16 %v893
      %v1055 = vunpack.c.l.b16 %v894
      %v1056 = vunpack.c.l.b16 %v895
      %v1057 = vunpack.c.l.b16 %v896
      %v1058 = vunpack.c.l.b16 %v897
      %v1059 = vunpack.c.l.b16 %v898
      %v1060 = vunpack.c.l.b16 %v899
      %v1061 = vunpack.c.l.b16 %v900
      %v1062 = vunpack.c.l.b16 %v901
      %v1063 = vunpack.c.l.b16 %v902
      %v1064 = vunpack.c.l.b16 %v903
      %v1065 = vunpack.c.l.b16 %v904
      %v1066 = vunpack.c.l.b16 %v905
      %v1067 = vunpack.c.l.b16 %v906
      %v1068 = vunpack.c.l.b16 %v907
      %v1069 = vunpack.c.l.b16 %v908
      %v1070 = vpack.c.b16 %v1055, %v1054
      %v1071 = vpack.c.b16 %v1057, %v1056
      %v1072 = vpack.c.b16 %v1059, %v1058
      %v1073 = vpack.c.b16 %v1061, %v1060
      %v1074 = vpack.c.b16 %v1063, %v1062
      %v1075 = vpack.c.b16 %v1065, %v1064
      %v1076 = vpack.c.b16 %v1067, %v1066
      %v1077 = vpack.c.b16 %v1069, %v1068
      %v1102 = vunpack.c.l.b16 %v909
      %v1103 = vunpack.c.l.b16 %v910
      %v1104 = vunpack.c.l.b16 %v911
      %v1105 = vunpack.c.l.b16 %v912
      %v1106 = vunpack.c.l.b16 %v913
      %v1107 = vunpack.c.l.b16 %v914
      %v1108 = vunpack.c.l.b16 %v915
      %v1109 = vunpack.c.l.b16 %v916
      %v1110 = vunpack.c.l.b16 %v917
      %v1111 = vunpack.c.l.b16 %v918
      %v1112 = vunpack.c.l.b16 %v919
      %v1113 = vunpack.c.l.b16 %v920
      %v1114 = vunpack.c.l.b16 %v921
      %v1115 = vunpack.c.l.b16 %v922
      %v1116 = vunpack.c.l.b16 %v923
      %v1117 = vunpack.c.l.b16 %v924
      %v1118 = vpack.c.b16 %v1103, %v1102
      %v1119 = vpack.c.b16 %v1105, %v1104
      %v1120 = vpack.c.b16 %v1107, %v1106
      %v1121 = vpack.c.b16 %v1109, %v1108
      %v1122 = vpack.c.b16 %v1111, %v1110
      %v1123 = vpack.c.b16 %v1113, %v1112
      %v1124 = vpack.c.b16 %v1115, %v1114
      %v1125 = vpack.c.b16 %v1117, %v1116
      %1134 = vmatpush.bf16.msra.mxu0 %v1125
      %1135 = vmatpush.bf16.msra.mxu0 %v1124
      %1136 = vmatpush.bf16.msra.mxu0 %v1123
      %1137 = vmatpush.bf16.msra.mxu0 %v1122
      %1138 = vmatpush.bf16.msra.mxu0 %v1121
      %1139 = vmatpush.bf16.msra.mxu0 %v1120
      %1140 = vmatpush.bf16.msra.mxu0 %v1119
      %1141 = vmatpush.bf16.msra.mxu0 %v1118
      %1142 = vmatmul.bf16.gmra.mxu0 %v1070
      %v1143 = vpop.f32.mrf.mxu0
      %v1144 = vadd.f32 %v999, %v1143
      %v1145 = vpop.f32.mrf.mxu0
      %v1146 = vadd.f32 %v1001, %v1145
      %1147 = vmatmul.bf16.gmra.mxu0 %v1071
      %v1148 = vpop.f32.mrf.mxu0
      %v1149 = vadd.f32 %v1004, %v1148
      %v1150 = vpop.f32.mrf.mxu0
      %v1151 = vadd.f32 %v1006, %v1150
      %1152 = vmatmul.bf16.gmra.mxu0 %v1072
      %v1153 = vpop.f32.mrf.mxu0
      %v1154 = vadd.f32 %v1009, %v1153
      %v1155 = vpop.f32.mrf.mxu0
      %v1156 = vadd.f32 %v1011, %v1155
      %1157 = vmatmul.bf16.gmra.mxu0 %v1073
      %v1158 = vpop.f32.mrf.mxu0
      %v1159 = vadd.f32 %v1014, %v1158
      %v1160 = vpop.f32.mrf.mxu0
      %v1161 = vadd.f32 %v1016, %v1160
      %1162 = vmatmul.bf16.gmra.mxu0 %v1074
      %v1163 = vpop.f32.mrf.mxu0
      %v1164 = vadd.f32 %v1019, %v1163
      %v1165 = vpop.f32.mrf.mxu0
      %v1166 = vadd.f32 %v1021, %v1165
      %1167 = vmatmul.bf16.gmra.mxu0 %v1075
      %v1168 = vpop.f32.mrf.mxu0
      %v1169 = vadd.f32 %v1024, %v1168
      %v1170 = vpop.f32.mrf.mxu0
      %v1171 = vadd.f32 %v1026, %v1170
      %1172 = vmatmul.bf16.gmra.mxu0 %v1076
      %v1173 = vpop.f32.mrf.mxu0
      %v1174 = vadd.f32 %v1029, %v1173
      %v1175 = vpop.f32.mrf.mxu0
      %v1176 = vadd.f32 %v1031, %v1175
      %1177 = vmatmul.bf16.gmra.mxu0 %v1077
      %v1178 = vpop.f32.mrf.mxu0
      %v1179 = vadd.f32 %v1034, %v1178
      %v1180 = vpop.f32.mrf.mxu0
      %v1181 = vadd.f32 %v1036, %v1180
      %1182 = vdwg.mxu0
      %v1183 = vld [vmem:[%s5] sm:$0x1]
      %v1185 = vperm.slane %v1183, 0
      %v1187 = vadd.f32 %v1144, %v1185
      %v1188 = vadd.f32 %v1146, %v1185
      %v1189 = vadd.f32 %v1149, %v1185
      %v1190 = vadd.f32 %v1151, %v1185
      %v1191 = vadd.f32 %v1154, %v1185
      %v1192 = vadd.f32 %v1156, %v1185
      %v1193 = vadd.f32 %v1159, %v1185
      %v1194 = vadd.f32 %v1161, %v1185
      %v1195 = vadd.f32 %v1164, %v1185
      %v1196 = vadd.f32 %v1166, %v1185
      %v1197 = vadd.f32 %v1169, %v1185
      %v1198 = vadd.f32 %v1171, %v1185
      %v1199 = vadd.f32 %v1174, %v1185
      %v1200 = vadd.f32 %v1176, %v1185
      %v1201 = vadd.f32 %v1179, %v1185
      %v1202 = vadd.f32 %v1181, %v1185
      %v1203 = vmax.f32 %v1187, 0.0
      %v1204 = vmax.f32 %v1188, 0.0
      %v1205 = vmax.f32 %v1189, 0.0
      %v1206 = vmax.f32 %v1190, 0.0
      %v1207 = vmax.f32 %v1191, 0.0
      %v1208 = vmax.f32 %v1192, 0.0
      %v1209 = vmax.f32 %v1193, 0.0
      %v1210 = vmax.f32 %v1194, 0.0
      %v1211 = vmax.f32 %v1195, 0.0
      %v1212 = vmax.f32 %v1196, 0.0
      %v1213 = vmax.f32 %v1197, 0.0
      %v1214 = vmax.f32 %v1198, 0.0
      %v1215 = vmax.f32 %v1199, 0.0
      %v1216 = vmax.f32 %v1200, 0.0
      %v1217 = vmax.f32 %v1201, 0.0
      %v1218 = vmax.f32 %v1202, 0.0
      %v1219 = vpack.c.bf16 %v1203, %v1203
      %v1220 = vpack.c.bf16 %v1204, %v1204
      %v1221 = vpack.c.bf16 %v1205, %v1205
      %v1222 = vpack.c.bf16 %v1206, %v1206
      %v1223 = vpack.c.bf16 %v1207, %v1207
      %v1224 = vpack.c.bf16 %v1208, %v1208
      %v1225 = vpack.c.bf16 %v1209, %v1209
      %v1226 = vpack.c.bf16 %v1210, %v1210
      %v1227 = vpack.c.bf16 %v1211, %v1211
      %v1228 = vpack.c.bf16 %v1212, %v1212
      %v1229 = vpack.c.bf16 %v1213, %v1213
      %v1230 = vpack.c.bf16 %v1214, %v1214
      %v1231 = vpack.c.bf16 %v1215, %v1215
      %v1232 = vpack.c.bf16 %v1216, %v1216
      %v1233 = vpack.c.bf16 %v1217, %v1217
      %v1234 = vpack.c.bf16 %v1218, %v1218
      %1235 = vst [vmem:[#allocation13] sm:$0xf] %v1219
      %1236 = vst [vmem:[#allocation13 + $0x4] sm:$0xf] %v1220
      %1237 = vst [vmem:[#allocation13 + $0x8] sm:$0xf] %v1221
      %1238 = vst [vmem:[#allocation13 + $0xc] sm:$0xf] %v1222
      %1239 = vst [vmem:[#allocation13 + $0x10] sm:$0xf] %v1223
      %1240 = vst [vmem:[#allocation13 + $0x14] sm:$0xf] %v1224
      %1241 = vst [vmem:[#allocation13 + $0x18] sm:$0xf] %v1225
      %1242 = vst [vmem:[#allocation13 + $0x1c] sm:$0xf] %v1226
      %1243 = vst [vmem:[#allocation13 + $0x20] sm:$0xf] %v1227
      %1244 = vst [vmem:[#allocation13 + $0x24] sm:$0xf] %v1228
      %1245 = vst [vmem:[#allocation13 + $0x28] sm:$0xf] %v1229
      %1246 = vst [vmem:[#allocation13 + $0x2c] sm:$0xf] %v1230
      %1247 = vst [vmem:[#allocation13 + $0x30] sm:$0xf] %v1231
      %1248 = vst [vmem:[#allocation13 + $0x34] sm:$0xf] %v1232
      %1249 = vst [vmem:[#allocation13 + $0x38] sm:$0xf] %v1233
      %1250 = vst [vmem:[#allocation13 + $0x3c] sm:$0xf] %v1234
    $region53: #{tpu_custom_call.1} parent=1 // pred_fallthru
      _
    // Predicated region
    $region54: #{tpu_custom_call.1} parent=1 // pred_check
      _
    $region55: #{tpu_custom_call.1} parent=1 // pred_check_branch
      %1252 = sbr.rel (0) target = $region57
    $region56: #{tpu_custom_call.1} parent=1 // pred_region
      %1254 = vsyncadd [#allocation6], 0
      %s1255 = sshll.u32 [#allocation13], 4
      %s1256 = int_to_ptr.vmem [resolvable:$true] %s1255
      %s1257 = sshll.u32 %s6, 4
      %s1258 = int_to_ptr.hbm [resolvable:$true] %s1257
      %1263 = dma.vmem_to_hbm [thread:$0]  %s1256, 1024, %s1258, [#allocation6], 64, 64, 4
    $region57: #{tpu_custom_call.1} parent=1 // pred_fallthru
      _
    // Predicated region
    $region58: #{tpu_custom_call.1} parent=1 // pred_check
      _
    $region59: #{tpu_custom_call.1} parent=1 // pred_check_branch
      %1265 = sbr.rel (0) target = $region61
    $region60: #{tpu_custom_call.1} parent=1 // pred_region
      %1267 = dma.done [#allocation6], 1024
    $region61: #{tpu_custom_call.1} parent=1 // pred_fallthru
      _
    %1268 = vsyncpa [#allocation5], 1
    %1269 = vsyncpa [#allocation8], 1
    %1270 = vsyncpa [#allocation11], 1
    %1271 = vsyncpa [#allocation6], 1

</llo_original>
